<compile_context>
chip_gen: v7x
topology: tpu7x:2x2x1
jax: 0.10.0
libtpu: 0.0.40
codegen_flags: <defaults>
</compile_context>

<pallas_src>
import functools

import jax
import jax.numpy as jnp
from jax.experimental import pallas as pl
from jax.experimental.pallas import tpu as pltpu

_LANE = 128
_SUBLANE = 8


def _round_up(n, m):
    return ((n + m - 1) // m) * m


def _mlp_kernel(x_ref, w1_ref, b1_ref, w2_ref, b2_ref, o_ref):
    # x_ref : (2, TB)  f32  collocation points, batch on lanes
    # w1_ref: (Hp, 2)  f32  fc1 weight (hidden on sublanes)
    # b1_ref: (Hp, 1)  f32  fc1 bias
    # w2_ref: (Hp, 1)  f32  fc2 weight
    # b2_ref: (1, 1)   f32  fc2 bias
    # o_ref : (1, TB)  f32  network output, batch on lanes
    x0 = x_ref[0:1, :]                                   # (1, TB)
    x1 = x_ref[1:2, :]                                   # (1, TB)

    # fc1 + tanh on the VPU/EUP: two broadcast-FMAs (only 2 input features),
    # no zero-padded MXU pass.
    h = jnp.tanh(w1_ref[:, 0:1] * x0 + w1_ref[:, 1:2] * x1 + b1_ref[...])   # (Hp, TB)

    # fc2 as an f32 weighted sublane reduction (VPU mul + XLU reduce).  Padded
    # hidden rows carry zero weights, so they contribute exactly 0.
    z = jnp.sum(w2_ref[...] * h, axis=0, keepdims=True) + b2_ref[...]       # (1, TB)
    o_ref[...] = z.astype(o_ref.dtype)


def pad_params(w1, b1, w2, b2):
    """Transpose/pad fc1/fc2 params ONCE (outside the hot path).

    w1: (2, H), b1: (H,), w2: (H, 1), b2: (1,)
    Returns (w1t, b1c, w2c, b2c):
      w1t (Hp, 2), b1c (Hp, 1), w2c (Hp, 1), b2c (1, 1), all f32,
      with Hp = round_up(H, 8).  Padded hidden rows are all-zero.
    """
    din, h = w1.shape
    hp = _round_up(h, _SUBLANE)
    w1t = jnp.zeros((hp, din), jnp.float32).at[:h, :].set(w1.T.astype(jnp.float32))
    b1c = jnp.zeros((hp, 1), jnp.float32).at[:h, 0].set(b1.astype(jnp.float32))
    w2c = jnp.zeros((hp, 1), jnp.float32).at[:h, 0].set(w2[:, 0].astype(jnp.float32))
    b2c = b2.astype(jnp.float32).reshape(1, 1)
    return w1t, b1c, w2c, b2c


@functools.partial(jax.jit, static_argnames=("block_rows", "core_parallel"))
def pde_solver_forward_padded(x, w1t, b1c, w2c, b2c, *, block_rows=2048,
                              core_parallel=False):
    """
    x:    (B, 2) float32 collocation points
    w1t:  (Hp, 2) f32, b1c: (Hp, 1) f32, w2c: (Hp, 1) f32, b2c: (1, 1) f32
          (from pad_params, computed once)
    returns (B, 1) float32
    """
    b, din = x.shape
    hp = w1t.shape[0]

    tb = _round_up(min(block_rows, _round_up(b, _LANE)), _LANE)
    bp = _round_up(b, tb)
    grid = (bp // tb,)

    xt = x.T.astype(jnp.float32)                          # (2, B) -- tiny transpose
    xp = xt if bp == b else jnp.zeros((din, bp), jnp.float32).at[:, :b].set(xt)

    cost = pl.CostEstimate(
        flops=6 * bp * hp,                                # fc1 (2 FMAs) + fc2 reduce
        transcendentals=bp * hp,                          # tanh
        bytes_accessed=(bp * din * 4 + bp * 4
                        + (w1t.size + b1c.size + w2c.size + b2c.size) * 4),
    )

    # Opt-in CORE_PARALLEL for v7x (2 TensorCores); "parallel" is safe everywhere.
    sem = (pltpu.CORE_PARALLEL,) if core_parallel else ("parallel",)

    out = pl.pallas_call(
        _mlp_kernel,
        out_shape=jax.ShapeDtypeStruct((1, bp), jnp.float32),
        grid=grid,
        in_specs=[
            pl.BlockSpec((din, tb), lambda i: (0, i)),    # x streams over batch lanes
            pl.BlockSpec((hp, din), lambda i: (0, 0)),    # params stay VMEM-resident
            pl.BlockSpec((hp, 1), lambda i: (0, 0)),
            pl.BlockSpec((hp, 1), lambda i: (0, 0)),
            pl.BlockSpec((1, 1), lambda i: (0, 0)),
        ],
        out_specs=pl.BlockSpec((1, tb), lambda i: (0, i)),  # lane-dense output
        compiler_params=pltpu.CompilerParams(dimension_semantics=sem),
        cost_estimate=cost,
    )(xp, w1t, b1c, w2c, b2c)

    return out[0, :b].reshape(b, 1)


def pde_solver_forward(x, w1, b1, w2, b2, *, block_rows=2048):
    """Convenience wrapper (pads params per call; prefer pad_params + padded fwd)."""
    w1t, b1c, w2c, b2c = pad_params(w1, b1, w2, b2)
    return pde_solver_forward_padded(x, w1t, b1c, w2c, b2c, block_rows=block_rows)


def init_params(key, num_hidden_nodes):
    """Deterministic init mimicking torch.nn.Linear (uniform +/- 1/sqrt(fan_in))."""
    k1, k2, k3, k4 = jax.random.split(key, 4)
    bound1 = 1.0 / jnp.sqrt(2.0)
    w1 = jax.random.uniform(k1, (2, num_hidden_nodes), jnp.float32, -bound1, bound1)
    b1 = jax.random.uniform(k2, (num_hidden_nodes,), jnp.float32, -bound1, bound1)
    bound2 = 1.0 / jnp.sqrt(float(num_hidden_nodes))
    w2 = jax.random.uniform(k3, (num_hidden_nodes, 1), jnp.float32, -bound2, bound2)
    b2 = jax.random.uniform(k4, (1,), jnp.float32, -bound2, bound2)
    return w1, b1, w2, b2


if __name__ == "__main__":
    key = jax.random.PRNGKey(0)
    k_x, k_x2, k_p = jax.random.split(key, 3)

    batch = 8
    num_hidden = 32

    x = jax.random.uniform(k_x, (batch, 2), jnp.float32)  # (x, y) collocation points
    w1, b1, w2, b2 = init_params(k_p, num_hidden)

    # Pad/transpose parameters ONCE (outside the hot path).
    w1t, b1c, w2c, b2c = pad_params(w1, b1, w2, b2)

    # Small-batch case (grid = (1,), batch padded 8 -> 128 on the lane axis).
    z = pde_solver_forward_padded(x, w1t, b1c, w2c, b2c)
    jax.block_until_ready(z)

    z_ref = jnp.tanh(x @ w1 + b1) @ w2 + b2
    assert z.shape == (batch, 1)
    # Whole kernel is f32 now -> tight tolerance vs the f32 reference.
    assert jnp.allclose(z, z_ref, atol=1e-4, rtol=1e-4)

    # Larger batch exercising batch padding (1000 -> 1024) on the lane axis.
    big_batch = 1000
    xb = jax.random.uniform(k_x2, (big_batch, 2), jnp.float32)
    zb = pde_solver_forward_padded(xb, w1t, b1c, w2c, b2c)
    jax.block_until_ready(zb)

    zb_ref = jnp.tanh(xb @ w1 + b1) @ w2 + b2
    assert zb.shape == (big_batch, 1)
    assert jnp.allclose(zb, zb_ref, atol=1e-4, rtol=1e-4)

    print("KERNEL_OK")
</pallas_src>

<mosaic_0001>
module attributes {stable_mosaic.version = 11 : i64} {
  func.func @_mlp_kernel(%arg0: i32, %arg1: memref<2x128xf32, #tpu.memory_space<vmem>>, %arg2: memref<32x2xf32, #tpu.memory_space<vmem>>, %arg3: memref<32x1xf32, #tpu.memory_space<vmem>>, %arg4: memref<32x1xf32, #tpu.memory_space<vmem>>, %arg5: memref<1x1xf32, #tpu.memory_space<vmem>>, %arg6: memref<1x128xf32, #tpu.memory_space<vmem>>) attributes {dimension_semantics = [#tpu.dimension_semantics<parallel>], iteration_bounds = array<i64: 1>, scalar_prefetch = 0 : i64, scratch_operands = 0 : i64, tpu.core_type = #tpu.core_type<tc>, window_params = [{transform_indices = @transform_0, window_bounds = array<i64: 2, 128>}, {pipeline_mode = #tpu.pipeline_mode<synchronous>, transform_indices = @transform_1, window_bounds = array<i64: 32, 2>}, {pipeline_mode = #tpu.pipeline_mode<synchronous>, transform_indices = @transform_2, window_bounds = array<i64: 32, 1>}, {pipeline_mode = #tpu.pipeline_mode<synchronous>, transform_indices = @transform_3, window_bounds = array<i64: 32, 1>}, {pipeline_mode = #tpu.pipeline_mode<synchronous>, transform_indices = @transform_4, window_bounds = array<i64: 1, 1>}, {transform_indices = @transform_5, window_bounds = array<i64: 1, 128>}]} {
    %c0 = arith.constant 0 : index
    %c0_0 = arith.constant 0 : index
    %0 = vector.load %arg1[%c0, %c0_0] : memref<2x128xf32, #tpu.memory_space<vmem>>, vector<1x128xf32>
    %c1 = arith.constant 1 : index
    %c0_1 = arith.constant 0 : index
    %1 = vector.load %arg1[%c1, %c0_1] : memref<2x128xf32, #tpu.memory_space<vmem>>, vector<1x128xf32>
    %c0_2 = arith.constant 0 : index
    %c0_3 = arith.constant 0 : index
    %2 = vector.load %arg2[%c0_2, %c0_3] : memref<32x2xf32, #tpu.memory_space<vmem>>, vector<32x1xf32>
    %3 = vector.broadcast %2 : vector<32x1xf32> to vector<32x128xf32>
    %4 = vector.broadcast %0 : vector<1x128xf32> to vector<32x128xf32>
    %5 = arith.mulf %3, %4 : vector<32x128xf32>
    %c0_4 = arith.constant 0 : index
    %c1_5 = arith.constant 1 : index
    %6 = vector.load %arg2[%c0_4, %c1_5] : memref<32x2xf32, #tpu.memory_space<vmem>>, vector<32x1xf32>
    %7 = vector.broadcast %6 : vector<32x1xf32> to vector<32x128xf32>
    %8 = vector.broadcast %1 : vector<1x128xf32> to vector<32x128xf32>
    %9 = arith.mulf %7, %8 : vector<32x128xf32>
    %10 = arith.addf %5, %9 : vector<32x128xf32>
    %c0_6 = arith.constant 0 : index
    %c0_7 = arith.constant 0 : index
    %11 = vector.load %arg3[%c0_6, %c0_7] : memref<32x1xf32, #tpu.memory_space<vmem>>, vector<32x1xf32>
    %12 = vector.broadcast %11 : vector<32x1xf32> to vector<32x128xf32>
    %13 = arith.addf %10, %12 : vector<32x128xf32>
    %14 = math.tanh %13 : vector<32x128xf32>
    %c0_8 = arith.constant 0 : index
    %c0_9 = arith.constant 0 : index
    %15 = vector.load %arg4[%c0_8, %c0_9] : memref<32x1xf32, #tpu.memory_space<vmem>>, vector<32x1xf32>
    %16 = vector.broadcast %15 : vector<32x1xf32> to vector<32x128xf32>
    %17 = arith.mulf %16, %14 : vector<32x128xf32>
    %cst = arith.constant dense<0.000000e+00> : vector<128xf32>
    %18 = vector.multi_reduction <add>, %17, %cst [0] : vector<32x128xf32> to vector<128xf32>
    %19 = vector.shape_cast %18 : vector<128xf32> to vector<1x128xf32>
    %c0_10 = arith.constant 0 : index
    %c0_11 = arith.constant 0 : index
    %20 = vector.load %arg5[%c0_10, %c0_11] : memref<1x1xf32, #tpu.memory_space<vmem>>, vector<1x1xf32>
    %21 = vector.broadcast %20 : vector<1x1xf32> to vector<1x128xf32>
    %22 = arith.addf %19, %21 : vector<1x128xf32>
    %c0_12 = arith.constant 0 : index
    %c0_13 = arith.constant 0 : index
    %23 = vector.load %arg6[%c0_12, %c0_13] : memref<1x128xf32, #tpu.memory_space<vmem>>, vector<1x128xf32>
    tpu.vector_store %arg6[%c0_12, %c0_13], %22 {strides = array<i32>} : memref<1x128xf32, #tpu.memory_space<vmem>>, vector<1x128xf32>,
    return
  }
  func.func @transform_0(%arg0: i32) -> (i32, i32) {
    %c0_i32 = arith.constant 0 : i32
    %c0_i32_0 = arith.constant 0 : i32
    return %c0_i32, %arg0 : i32, i32
  }
  func.func @transform_1(%arg0: i32) -> (i32, i32) {
    %c0_i32 = arith.constant 0 : i32
    %c0_i32_0 = arith.constant 0 : i32
    %c0_i32_1 = arith.constant 0 : i32
    return %c0_i32, %c0_i32_0 : i32, i32
  }
  func.func @transform_2(%arg0: i32) -> (i32, i32) {
    %c0_i32 = arith.constant 0 : i32
    %c0_i32_0 = arith.constant 0 : i32
    %c0_i32_1 = arith.constant 0 : i32
    return %c0_i32, %c0_i32_0 : i32, i32
  }
  func.func @transform_3(%arg0: i32) -> (i32, i32) {
    %c0_i32 = arith.constant 0 : i32
    %c0_i32_0 = arith.constant 0 : i32
    %c0_i32_1 = arith.constant 0 : i32
    return %c0_i32, %c0_i32_0 : i32, i32
  }
  func.func @transform_4(%arg0: i32) -> (i32, i32) {
    %c0_i32 = arith.constant 0 : i32
    %c0_i32_0 = arith.constant 0 : i32
    %c0_i32_1 = arith.constant 0 : i32
    return %c0_i32, %c0_i32_0 : i32, i32
  }
  func.func @transform_5(%arg0: i32) -> (i32, i32) {
    %c0_i32 = arith.constant 0 : i32
    %c0_i32_0 = arith.constant 0 : i32
    return %c0_i32, %arg0 : i32, i32
  }
}

</mosaic_0001>

<llo_original>
// kernel: pde_solver_forward_padded.1
$region0: #{pde_solver_forward_padded.1}
  #allocation0 [shape = 'u32[]', space=smem, size = 0x4, offset = 0x4, fixed_abs, tag = 'smem constant byte address 0x4 - core index']
  #allocation1 [shape = 'u32[144,128]{1,0:T(1,128)}', space=vmem, size = 0x12000, scoped, tag = 'internal scratch']
  #allocation2 [shape = 'f32[1,1]{1,0:T(1,128)S(1)}', space=vmem, size = 0x200, scoped, tag = 'scoped memory for pde_solver_forward_padded.1']
  %s0 = inlined_call_operand.vmem [shape: f32[2,128], index: 0, kind: input, shape index: {}]
  %s1 = inlined_call_operand.vmem [shape: f32[32,2], index: 1, kind: input, shape index: {}]
  %s2 = inlined_call_operand.vmem [shape: f32[32,1], index: 2, kind: input, shape index: {}]
  %s3 = inlined_call_operand.vmem [shape: f32[32,1], index: 3, kind: input, shape index: {}]
  %s4 = inlined_call_operand.<no memory space> [shape: f32[1,1], index: 4, kind: input, shape index: {}]
  %s5 = inlined_call_operand.vmem [shape: f32[1,128], index: 5, kind: output, shape index: {}]
  %s6 = sld [smem:[#allocation0]]
  $region30: #{pde_solver_forward_padded.1} parent=0
    _
  %s8 = ssub.s32 1, %s6
  %s9 = scalar_select 0, %s8, %s6
  %v10 = vstv %s4
  %11 = vst [vmem:[#allocation2] sm:$0x1] %v10
  // Predicated region
  $region2: #{pde_solver_forward_padded.1} parent=0 // pred_check
    _
  $region3: #{pde_solver_forward_padded.1} parent=0 // pred_check_branch
    %13 = sbr.rel (0) target = $region5
  $region4: #{pde_solver_forward_padded.1} parent=0 // pred_region
    _
  $region5: #{pde_solver_forward_padded.1} parent=0 // pred_fallthru
    _
  // Predicated region
  $region6: #{pde_solver_forward_padded.1} parent=0 // pred_check
    _
  $region7: #{pde_solver_forward_padded.1} parent=0 // pred_check_branch
    %15 = sbr.rel (0) target = $region9
  $region8: #{pde_solver_forward_padded.1} parent=0 // pred_region
    _
  $region9: #{pde_solver_forward_padded.1} parent=0 // pred_fallthru
    _
  // Predicated region
  $region10: #{pde_solver_forward_padded.1} parent=0 // pred_check
    _
  $region11: #{pde_solver_forward_padded.1} parent=0 // pred_check_branch
    %17 = sbr.rel (0) target = $region13
  $region12: #{pde_solver_forward_padded.1} parent=0 // pred_region
    _
  $region13: #{pde_solver_forward_padded.1} parent=0 // pred_fallthru
    _
  // Predicated region
  $region14: #{pde_solver_forward_padded.1} parent=0 // pred_check
    _
  $region15: #{pde_solver_forward_padded.1} parent=0 // pred_check_branch
    %19 = sbr.rel (0) target = $region17
  $region16: #{pde_solver_forward_padded.1} parent=0 // pred_region
    _
  $region17: #{pde_solver_forward_padded.1} parent=0 // pred_fallthru
    _
  // Predicated region
  $region18: #{pde_solver_forward_padded.1} parent=0 // pred_check
    _
  $region19: #{pde_solver_forward_padded.1} parent=0 // pred_check_branch
    %21 = sbr.rel (0) target = $region21
  $region20: #{pde_solver_forward_padded.1} parent=0 // pred_region
    _
  $region21: #{pde_solver_forward_padded.1} parent=0 // pred_fallthru
    _
  %v22 = vld [vmem:[%s0] sm:$0x1]
  %v23 = vld [vmem:[%s0 + $0x1] sm:$0x1]
  %v24 = vld [vmem:[%s1] sm:$0xff]
  %v25 = vld [vmem:[%s1 + $0x8] sm:$0xff]
  %v26 = vld [vmem:[%s1 + $0x10] sm:$0xff]
  %v27 = vld [vmem:[%s1 + $0x18] sm:$0xff]
  %29 = vset.pattern.permute.xlu0 0
  %30 = vperm.xlu0 %29, %v24
  %v31 = vpop.permute.xlu0 %30
  %34 = vset.pattern.permute.xlu0 0
  %35 = vperm.xlu0 %34, %v25
  %v36 = vpop.permute.xlu0 %35
  %39 = vset.pattern.permute.xlu0 0
  %40 = vperm.xlu0 %39, %v26
  %v41 = vpop.permute.xlu0 %40
  %44 = vset.pattern.permute.xlu0 0
  %45 = vperm.xlu0 %44, %v27
  %v46 = vpop.permute.xlu0 %45
  %v48 = vlaneseq
  %v49 = vshrl.u32 %v48, 7
  %v50 = vsub.s32 0, %v49
  %v51 = vrot.slane %v22, %v50
  %v52 = vmul.f32 %v31, %v51
  %v53 = vmul.f32 %v36, %v51
  %v54 = vmul.f32 %v41, %v51
  %v55 = vmul.f32 %v46, %v51
  %56 = vset.pattern.permute.xlu0 1
  %57 = vperm.xlu0 %56, %v24
  %v58 = vpop.permute.xlu0 %57
  %60 = vset.pattern.permute.xlu0 1
  %61 = vperm.xlu0 %60, %v25
  %v62 = vpop.permute.xlu0 %61
  %64 = vset.pattern.permute.xlu0 1
  %65 = vperm.xlu0 %64, %v26
  %v66 = vpop.permute.xlu0 %65
  %68 = vset.pattern.permute.xlu0 1
  %69 = vperm.xlu0 %68, %v27
  %v70 = vpop.permute.xlu0 %69
  %v72 = vlaneseq
  %v73 = vshrl.u32 %v72, 7
  %v74 = vsub.s32 0, %v73
  %v75 = vrot.slane %v23, %v74
  %v76 = vmul.f32 %v58, %v75
  %v77 = vmul.f32 %v62, %v75
  %v78 = vmul.f32 %v66, %v75
  %v79 = vmul.f32 %v70, %v75
  %v80 = vadd.f32 %v52, %v76
  %v81 = vadd.f32 %v53, %v77
  %v82 = vadd.f32 %v54, %v78
  %v83 = vadd.f32 %v55, %v79
  %v84 = vld [vmem:[%s2] sm:$0xff]
  %v85 = vld [vmem:[%s2 + $0x8] sm:$0xff]
  %v86 = vld [vmem:[%s2 + $0x10] sm:$0xff]
  %v87 = vld [vmem:[%s2 + $0x18] sm:$0xff]
  %89 = vset.pattern.permute.xlu0 0
  %90 = vperm.xlu0 %89, %v84
  %v91 = vpop.permute.xlu0 %90
  %94 = vset.pattern.permute.xlu0 0
  %95 = vperm.xlu0 %94, %v85
  %v96 = vpop.permute.xlu0 %95
  %99 = vset.pattern.permute.xlu0 0
  %100 = vperm.xlu0 %99, %v86
  %v101 = vpop.permute.xlu0 %100
  %104 = vset.pattern.permute.xlu0 0
  %105 = vperm.xlu0 %104, %v87
  %v106 = vpop.permute.xlu0 %105
  %v108 = vadd.f32 %v80, %v91
  %v109 = vadd.f32 %v81, %v96
  %v110 = vadd.f32 %v82, %v101
  %v111 = vadd.f32 %v83, %v106
  %v112 = vtanh.pop %v108
  %v113 = vtanh.pop %v109
  %v114 = vtanh.pop %v110
  %v115 = vtanh.pop %v111
  %v116 = vld [vmem:[%s3] sm:$0xff]
  %v117 = vld [vmem:[%s3 + $0x8] sm:$0xff]
  %v118 = vld [vmem:[%s3 + $0x10] sm:$0xff]
  %v119 = vld [vmem:[%s3 + $0x18] sm:$0xff]
  %121 = vset.pattern.permute.xlu0 0
  %122 = vperm.xlu0 %121, %v116
  %v123 = vpop.permute.xlu0 %122
  %126 = vset.pattern.permute.xlu0 0
  %127 = vperm.xlu0 %126, %v117
  %v128 = vpop.permute.xlu0 %127
  %131 = vset.pattern.permute.xlu0 0
  %132 = vperm.xlu0 %131, %v118
  %v133 = vpop.permute.xlu0 %132
  %136 = vset.pattern.permute.xlu0 0
  %137 = vperm.xlu0 %136, %v119
  %v138 = vpop.permute.xlu0 %137
  %v140 = vmul.f32 %v123, %v112
  %v141 = vmul.f32 %v128, %v113
  %v142 = vmul.f32 %v133, %v114
  %v143 = vmul.f32 %v138, %v115
  %v144 = vadd.f32 %v140, %v141
  %v145 = vadd.f32 %v144, %v142
  %v146 = vadd.f32 %v145, %v143
  %v147 = vrot.slane %v146, 4
  %v148 = vadd.f32 %v146, %v147
  %v149 = vrot.slane %v148, 2
  %v150 = vadd.f32 %v148, %v149
  %v151 = vrot.slane %v150, 1
  %v152 = vadd.f32 %v150, %v151
  %v153 = vld [vmem:[#allocation2] sm:$0x1]
  %155 = vset.pattern.permute.xlu0 0
  %156 = vperm.xlu0 %155, %v153
  %v157 = vpop.permute.xlu0 %156
  %v159 = vlaneseq
  %v160 = vshrl.u32 %v159, 7
  %v161 = vsub.s32 0, %v160
  %v162 = vrot.slane %v157, %v161
  %v163 = vadd.f32 %v152, %v162
  %164 = vst [vmem:[%s5] sm:$0x1] %v163
  // Predicated region
  $region22: #{pde_solver_forward_padded.1} parent=0 // pred_check
    _
  $region23: #{pde_solver_forward_padded.1} parent=0 // pred_check_branch
    %166 = sbr.rel (0) target = $region25
  $region24: #{pde_solver_forward_padded.1} parent=0 // pred_region
    _
  $region25: #{pde_solver_forward_padded.1} parent=0 // pred_fallthru
    _
  // Predicated region
  $region26: #{pde_solver_forward_padded.1} parent=0 // pred_check
    _
  $region27: #{pde_solver_forward_padded.1} parent=0 // pred_check_branch
    %168 = sbr.rel (0) target = $region29
  $region28: #{pde_solver_forward_padded.1} parent=0 // pred_region
    _
  $region29: #{pde_solver_forward_padded.1} parent=0 // pred_fallthru
    _

</llo_original>
